<compile_context>
chip_gen: v7x
topology: tpu7x:2x2x1
jax: 0.10.0
libtpu: 0.0.40
codegen_flags: <defaults>
</compile_context>

<pallas_src>
import jax
import jax.numpy as jnp
from jax import lax
from jax.experimental import pallas as pl
from jax.experimental.pallas import tpu as pltpu


def lstm_last_linear_kernel(x_ref, wih_ref, whh_ref, bias_ref, wout_ref,
                            bout_ref, o_ref, xw_ref):
    """Whole LSTM recurrence + final Linear for one batch tile.

    x_ref:    (1, T*Bt, I)  time-major rows for this batch tile
    wih_ref:  (I, 4H)       input->gates, columns (i, f, o, g), g cols pre-scaled by 2
    whh_ref:  (H, 4H)       hidden->gates, columns (i, f, o, g), g cols pre-scaled by 2
    bias_ref: (1, 4H)       combined bias (b_ih + b_hh), reordered, g pre-scaled by 2
    wout_ref: (1, H)        final linear weight as a row
    bout_ref: (1, 1)        final linear bias
    o_ref:    (Bt, 1)       output for this batch tile
    xw_ref:   (T*Bt, 4H)    VMEM scratch for the precomputed input projection
    """
    TB = xw_ref.shape[0]
    H4 = whh_ref.shape[1]
    H = H4 // 4
    Bt = o_ref.shape[0]
    T = TB // Bt

    # --- Preamble: one batched input projection for all timesteps (one MXU
    # call, off the serial h->h chain). Gates arrive pre-scaled for the
    # single-sigmoid trick because the wrapper folded the x2 into the weights.
    xw_ref[...] = (jnp.dot(x_ref[0], wih_ref[...],
                           preferred_element_type=jnp.float32)
                   + bias_ref[...])

    # TODO(synk): if bundle dumps show Mosaic re-pushing this (H, 4H) RHS into
    # the MXU every step, switch to pltpu.matmul_push_rhs/acc_lhs/pop to keep
    # it resident in the weight staging registers across the recurrence.
    whh = whh_ref[...]

    # Hoisted per-lane fixup constants for the single-sigmoid activation pass:
    #   act = sigmoid(gates_scaled) * mulB + addB
    # i/f/o lanes [0, 3H): mul=1, add=0;   g lanes [3H, 4H): mul=2, add=-1
    # (tanh(x) = 2*sigmoid(2x) - 1, and the "2x" was folded into the weights).
    lane = lax.broadcasted_iota(jnp.int32, (1, H4), 1)
    is_g = lane >= 3 * H
    mulB = jnp.where(is_g, jnp.float32(2.0), jnp.float32(1.0))
    addB = jnp.where(is_g, jnp.float32(-1.0), jnp.float32(0.0))

    def step(t, carry):
        h, c = carry
        row = pl.multiple_of(t * Bt, Bt)
        gates = xw_ref[pl.ds(row, Bt), :] + jnp.dot(
            h, whh, preferred_element_type=jnp.float32)        # (Bt, 4H)
        # ONE whole-vreg EUP op + two hoisted-constant VPU fixups.
        act = jax.nn.sigmoid(gates) * mulB + addB
        i_g = act[:, 0 * H:1 * H]
        f_g = act[:, 1 * H:2 * H]
        o_g = act[:, 2 * H:3 * H]
        g_g = act[:, 3 * H:4 * H]
        c_new = f_g * c + i_g * g_g
        h_new = o_g * jnp.tanh(c_new)
        return (h_new, c_new)

    h0 = jnp.zeros((Bt, H), jnp.float32)
    c0 = jnp.zeros((Bt, H), jnp.float32)
    unroll = True if T <= 16 else 8
    h_last, _ = lax.fori_loop(0, T, step, (h0, c0), unroll=unroll)

    # --- Final Linear(H, 1): VPU multiply + lane reduction (no N=1 MXU call).
    o_ref[...] = (jnp.sum(h_last * wout_ref[...], axis=-1, keepdims=True)
                  + bout_ref[...])


def lstm_model_forward(x_btc, params, *, block_b=8):
    """x_btc: (B, T, I) float32, PyTorch batch_first layout."""
    B, T, I = x_btc.shape
    H = params["w_hh"].shape[1] // 4
    H4 = 4 * H

    # Pad batch to a multiple of block_b so every per-step slice and the gate
    # vreg stay aligned (and so the grid tiles evenly).
    B_pad = ((B + block_b - 1) // block_b) * block_b
    if B_pad != B:
        x_btc = jnp.pad(x_btc, ((0, B_pad - B), (0, 0), (0, 0)))
    nb = B_pad // block_b

    def reorder(w):
        # PyTorch gate order (i, f, g, o) -> kernel order (i, f, o, g).
        return jnp.concatenate([w[..., 0 * H:1 * H], w[..., 1 * H:2 * H],
                                w[..., 3 * H:4 * H], w[..., 2 * H:3 * H]],
                               axis=-1)

    # Fold the single-sigmoid trick's x2 on the g-block *inputs* into the
    # weights/bias so the kernel never scales gates per step.
    gate_scale = jnp.concatenate(
        [jnp.ones((3 * H,), jnp.float32), jnp.full((H,), 2.0, jnp.float32)])

    w_ih = reorder(params["w_ih"]) * gate_scale                    # (I, 4H)
    w_hh = reorder(params["w_hh"]) * gate_scale                    # (H, 4H)
    bias = (reorder(params["b_ih"] + params["b_hh"]) * gate_scale
            ).reshape(1, H4)
    w_out = params["w_out"].reshape(1, H)                          # row vector
    b_out = params["b_out"].reshape(1, 1)

    # Lay x out as (nb, T*block_b, I), rows time-major inside each batch tile,
    # so the kernel preamble is a single contiguous 2-D matmul per tile.
    x_t = jnp.transpose(x_btc, (1, 0, 2))                          # (T, B_pad, I)
    x_t = x_t.reshape(T, nb, block_b, I).transpose(1, 0, 2, 3)     # (nb, T, Bt, I)
    x_tiled = x_t.reshape(nb, T * block_b, I)

    # Explicit scoped-VMEM budget sized from the xw scratch (+ headroom),
    # capped at 64 MiB so it is valid on v7x as well as v5e/v6e.
    # TODO(synk): for very long T, chunk the input projection over time
    # (2-slot (T_chunk*Bt, 4H) scratch refilled every T_chunk steps) instead
    # of materializing all T*Bt rows of xw.
    xw_bytes = T * block_b * H4 * 4
    vmem_limit = int(min(64 * 1024 * 1024,
                         max(16 * 1024 * 1024, 2 * xw_bytes + 8 * 1024 * 1024)))

    out = pl.pallas_call(
        lstm_last_linear_kernel,
        out_shape=jax.ShapeDtypeStruct((B_pad, 1), jnp.float32),
        grid=(nb,),
        in_specs=[
            pl.BlockSpec((1, T * block_b, I), lambda b: (b, 0, 0)),
            pl.BlockSpec((I, H4), lambda b: (0, 0)),
            pl.BlockSpec((H, H4), lambda b: (0, 0)),
            pl.BlockSpec((1, H4), lambda b: (0, 0)),
            pl.BlockSpec((1, H), lambda b: (0, 0)),
            pl.BlockSpec((1, 1), lambda b: (0, 0)),
        ],
        out_specs=pl.BlockSpec((block_b, 1), lambda b: (b, 0)),
        scratch_shapes=[pltpu.VMEM((T * block_b, H4), jnp.float32)],
        compiler_params=pltpu.CompilerParams(
            dimension_semantics=("parallel",),
            vmem_limit_bytes=vmem_limit),
    )(x_tiled, w_ih, w_hh, bias, w_out, b_out)
    return out[:B]


def init_params(key, input_size=4, hidden_size=32):
    """Deterministic init mimicking PyTorch shapes (stored pre-transposed,
    gate order i, f, g, o along the 4H axis, exactly like nn.LSTM)."""
    k = 1.0 / jnp.sqrt(hidden_size)
    keys = jax.random.split(key, 6)
    H, I = hidden_size, input_size
    w_ih = jax.random.uniform(keys[0], (I, 4 * H), jnp.float32, -k, k)
    w_hh = jax.random.uniform(keys[1], (H, 4 * H), jnp.float32, -k, k)
    b_ih = jax.random.uniform(keys[2], (4 * H,), jnp.float32, -k, k)
    b_hh = jax.random.uniform(keys[3], (4 * H,), jnp.float32, -k, k)
    w_out = jax.random.uniform(keys[4], (H, 1), jnp.float32, -k, k)
    b_out = jax.random.uniform(keys[5], (1,), jnp.float32, -k, k)
    return dict(w_ih=w_ih, w_hh=w_hh, b_ih=b_ih, b_hh=b_hh,
                w_out=w_out, b_out=b_out)


def reference_forward(x_btc, params):
    """Pure-JAX reference matching PyTorch nn.LSTM semantics (gate order
    i, f, g, o; un-reordered, un-scaled weights)."""
    B, T, I = x_btc.shape
    H = params["w_hh"].shape[1] // 4
    bias = params["b_ih"] + params["b_hh"]

    def step(carry, x_t):
        h, c = carry
        gates = x_t @ params["w_ih"] + h @ params["w_hh"] + bias
        i_g = jax.nn.sigmoid(gates[:, 0 * H:1 * H])
        f_g = jax.nn.sigmoid(gates[:, 1 * H:2 * H])
        g_g = jnp.tanh(gates[:, 2 * H:3 * H])
        o_g = jax.nn.sigmoid(gates[:, 3 * H:4 * H])
        c = f_g * c + i_g * g_g
        h = o_g * jnp.tanh(c)
        return (h, c), None

    h0 = jnp.zeros((B, H), jnp.float32)
    c0 = jnp.zeros((B, H), jnp.float32)
    (h_last, _), _ = lax.scan(step, (h0, c0), jnp.transpose(x_btc, (1, 0, 2)))
    return h_last @ params["w_out"] + params["b_out"].reshape(1, 1)


if __name__ == "__main__":
    B, T, I, H = 8, 8, 4, 32
    key = jax.random.PRNGKey(0)
    k_x, k_p = jax.random.split(key)
    x = jax.random.normal(k_x, (B, T, I), jnp.float32)
    params = init_params(k_p, input_size=I, hidden_size=H)

    out = lstm_model_forward(x, params)
    out = jax.block_until_ready(out)

    ref = reference_forward(x, params)
    assert out.shape == (B, 1)
    assert jnp.allclose(out, ref, atol=1e-4, rtol=1e-4), "mismatch vs reference"
    print("KERNEL_OK")
</pallas_src>

<mosaic_0001>
module attributes {stable_mosaic.version = 11 : i64} {
  func.func @lstm_last_linear_kernel(%arg0: i32, %arg1: memref<1x64x4xf32, #tpu.memory_space<vmem>>, %arg2: memref<4x128xf32, #tpu.memory_space<vmem>>, %arg3: memref<32x128xf32, #tpu.memory_space<vmem>>, %arg4: memref<1x128xf32, #tpu.memory_space<vmem>>, %arg5: memref<1x32xf32, #tpu.memory_space<vmem>>, %arg6: memref<1x1xf32, #tpu.memory_space<vmem>>, %arg7: memref<8x1xf32, #tpu.memory_space<vmem>>, %arg8: memref<64x128xf32, #tpu.memory_space<vmem>>) attributes {dimension_semantics = [#tpu.dimension_semantics<parallel>], iteration_bounds = array<i64: 1>, scalar_prefetch = 0 : i64, scratch_operands = 1 : i64, tpu.core_type = #tpu.core_type<tc>, window_params = [{transform_indices = @transform_0, window_bounds = array<i64: 1, 64, 4>}, {pipeline_mode = #tpu.pipeline_mode<synchronous>, transform_indices = @transform_1, window_bounds = array<i64: 4, 128>}, {pipeline_mode = #tpu.pipeline_mode<synchronous>, transform_indices = @transform_2, window_bounds = array<i64: 32, 128>}, {pipeline_mode = #tpu.pipeline_mode<synchronous>, transform_indices = @transform_3, window_bounds = array<i64: 1, 128>}, {pipeline_mode = #tpu.pipeline_mode<synchronous>, transform_indices = @transform_4, window_bounds = array<i64: 1, 32>}, {pipeline_mode = #tpu.pipeline_mode<synchronous>, transform_indices = @transform_5, window_bounds = array<i64: 1, 1>}, {transform_indices = @transform_6, window_bounds = array<i64: 8, 1>}]} {
    %c0 = arith.constant 0 : index
    %c0_0 = arith.constant 0 : index
    %c0_1 = arith.constant 0 : index
    %0 = vector.load %arg1[%c0, %c0_0, %c0_1] : memref<1x64x4xf32, #tpu.memory_space<vmem>>, vector<1x64x4xf32>
    %1 = vector.shape_cast %0 : vector<1x64x4xf32> to vector<64x4xf32>
    %c0_2 = arith.constant 0 : index
    %c0_3 = arith.constant 0 : index
    %2 = vector.load %arg2[%c0_2, %c0_3] : memref<4x128xf32, #tpu.memory_space<vmem>>, vector<4x128xf32>
    %cst = arith.constant dense<0.000000e+00> : vector<64x128xf32>
    %3 = tpu.matmul %1, %2, %cst {dimension_numbers = #tpu.dot_dimension_numbers<[1], [0], [0], [1], [0, 0, 1, 1], [], []>} : vector<64x4xf32>, vector<4x128xf32>, vector<64x128xf32> -> vector<64x128xf32>
    %c0_4 = arith.constant 0 : index
    %c0_5 = arith.constant 0 : index
    %4 = vector.load %arg4[%c0_4, %c0_5] : memref<1x128xf32, #tpu.memory_space<vmem>>, vector<1x128xf32>
    %5 = vector.broadcast %4 : vector<1x128xf32> to vector<64x128xf32>
    %6 = arith.addf %3, %5 : vector<64x128xf32>
    %c0_6 = arith.constant 0 : index
    %c0_7 = arith.constant 0 : index
    %7 = vector.load %arg8[%c0_6, %c0_7] : memref<64x128xf32, #tpu.memory_space<vmem>>, vector<64x128xf32>
    tpu.vector_store %arg8[%c0_6, %c0_7], %6 {strides = array<i32>} : memref<64x128xf32, #tpu.memory_space<vmem>>, vector<64x128xf32>,
    %c0_8 = arith.constant 0 : index
    %c0_9 = arith.constant 0 : index
    %8 = vector.load %arg3[%c0_8, %c0_9] : memref<32x128xf32, #tpu.memory_space<vmem>>, vector<32x128xf32>
    %9 = tpu.iota {dimensions = array<i32: 1>} : vector<1x128xi32>
    %c96_i32 = arith.constant 96 : i32
    %10 = vector.broadcast %c96_i32 : i32 to vector<1x128xi32>
    %11 = arith.cmpi sge, %9, %10 : vector<1x128xi32>
    %cst_10 = arith.constant 2.000000e+00 : f32
    %cst_11 = arith.constant 1.000000e+00 : f32
    %12 = vector.broadcast %cst_10 : f32 to vector<1x128xf32>
    %13 = vector.broadcast %cst_11 : f32 to vector<1x128xf32>
    %14 = arith.select %11, %12, %13 : vector<1x128xi1>, vector<1x128xf32>
    %cst_12 = arith.constant -1.000000e+00 : f32
    %cst_13 = arith.constant 0.000000e+00 : f32
    %15 = vector.broadcast %cst_12 : f32 to vector<1x128xf32>
    %16 = vector.broadcast %cst_13 : f32 to vector<1x128xf32>
    %17 = arith.select %11, %15, %16 : vector<1x128xi1>, vector<1x128xf32>
    %cst_14 = arith.constant 0.000000e+00 : f32
    %18 = vector.broadcast %cst_14 : f32 to vector<8x32xf32>
    %cst_15 = arith.constant 0.000000e+00 : f32
    %19 = vector.broadcast %cst_15 : f32 to vector<8x32xf32>
    %c0_i32 = arith.constant 0 : i32
    %c8_i32 = arith.constant 8 : i32
    %20 = arith.muli %c0_i32, %c8_i32 : i32
    %21 = tpu.assume_multiple %20, 8 : i32
    %22 = arith.index_cast %21 : i32 to index
    %c0_16 = arith.constant 0 : index
    %23 = vector.load %arg8[%22, %c0_16] : memref<64x128xf32, #tpu.memory_space<vmem>>, vector<8x128xf32>
    %cst_17 = arith.constant dense<0.000000e+00> : vector<8x128xf32>
    %24 = tpu.matmul %18, %8, %cst_17 {dimension_numbers = #tpu.dot_dimension_numbers<[1], [0], [0], [1], [0, 0, 1, 1], [], []>} : vector<8x32xf32>, vector<32x128xf32>, vector<8x128xf32> -> vector<8x128xf32>
    %25 = arith.addf %23, %24 : vector<8x128xf32>
    %26 = arith.negf %25 : vector<8x128xf32>
    %27 = math.exp %26 : vector<8x128xf32>
    %cst_18 = arith.constant 1.000000e+00 : f32
    %28 = vector.broadcast %cst_18 : f32 to vector<8x128xf32>
    %29 = arith.addf %28, %27 : vector<8x128xf32>
    %30 = arith.divf %28, %29 : vector<8x128xf32>
    %31 = vector.broadcast %14 : vector<1x128xf32> to vector<8x128xf32>
    %32 = arith.mulf %30, %31 : vector<8x128xf32>
    %33 = vector.broadcast %17 : vector<1x128xf32> to vector<8x128xf32>
    %34 = arith.addf %32, %33 : vector<8x128xf32>
    %35 = vector.extract_strided_slice %34 {offsets = [0, 0], sizes = [8, 32], strides = [1, 1]} : vector<8x128xf32> to vector<8x32xf32>
    %36 = vector.extract_strided_slice %34 {offsets = [0, 32], sizes = [8, 32], strides = [1, 1]} : vector<8x128xf32> to vector<8x32xf32>
    %37 = vector.extract_strided_slice %34 {offsets = [0, 64], sizes = [8, 32], strides = [1, 1]} : vector<8x128xf32> to vector<8x32xf32>
    %38 = vector.extract_strided_slice %34 {offsets = [0, 96], sizes = [8, 32], strides = [1, 1]} : vector<8x128xf32> to vector<8x32xf32>
    %39 = arith.mulf %36, %19 : vector<8x32xf32>
    %40 = arith.mulf %35, %38 : vector<8x32xf32>
    %41 = arith.addf %39, %40 : vector<8x32xf32>
    %42 = math.tanh %41 : vector<8x32xf32>
    %43 = arith.mulf %37, %42 : vector<8x32xf32>
    %c1_i32 = arith.constant 1 : i32
    %c8_i32_19 = arith.constant 8 : i32
    %44 = arith.muli %c1_i32, %c8_i32_19 : i32
    %45 = tpu.assume_multiple %44, 8 : i32
    %46 = arith.index_cast %45 : i32 to index
    %c0_20 = arith.constant 0 : index
    %47 = vector.load %arg8[%46, %c0_20] : memref<64x128xf32, #tpu.memory_space<vmem>>, vector<8x128xf32>
    %cst_21 = arith.constant dense<0.000000e+00> : vector<8x128xf32>
    %48 = tpu.matmul %43, %8, %cst_21 {dimension_numbers = #tpu.dot_dimension_numbers<[1], [0], [0], [1], [0, 0, 1, 1], [], []>} : vector<8x32xf32>, vector<32x128xf32>, vector<8x128xf32> -> vector<8x128xf32>
    %49 = arith.addf %47, %48 : vector<8x128xf32>
    %50 = arith.negf %49 : vector<8x128xf32>
    %51 = math.exp %50 : vector<8x128xf32>
    %cst_22 = arith.constant 1.000000e+00 : f32
    %52 = vector.broadcast %cst_22 : f32 to vector<8x128xf32>
    %53 = arith.addf %52, %51 : vector<8x128xf32>
    %54 = arith.divf %52, %53 : vector<8x128xf32>
    %55 = vector.broadcast %14 : vector<1x128xf32> to vector<8x128xf32>
    %56 = arith.mulf %54, %55 : vector<8x128xf32>
    %57 = vector.broadcast %17 : vector<1x128xf32> to vector<8x128xf32>
    %58 = arith.addf %56, %57 : vector<8x128xf32>
    %59 = vector.extract_strided_slice %58 {offsets = [0, 0], sizes = [8, 32], strides = [1, 1]} : vector<8x128xf32> to vector<8x32xf32>
    %60 = vector.extract_strided_slice %58 {offsets = [0, 32], sizes = [8, 32], strides = [1, 1]} : vector<8x128xf32> to vector<8x32xf32>
    %61 = vector.extract_strided_slice %58 {offsets = [0, 64], sizes = [8, 32], strides = [1, 1]} : vector<8x128xf32> to vector<8x32xf32>
    %62 = vector.extract_strided_slice %58 {offsets = [0, 96], sizes = [8, 32], strides = [1, 1]} : vector<8x128xf32> to vector<8x32xf32>
    %63 = arith.mulf %60, %41 : vector<8x32xf32>
    %64 = arith.mulf %59, %62 : vector<8x32xf32>
    %65 = arith.addf %63, %64 : vector<8x32xf32>
    %66 = math.tanh %65 : vector<8x32xf32>
    %67 = arith.mulf %61, %66 : vector<8x32xf32>
    %c2_i32 = arith.constant 2 : i32
    %c8_i32_23 = arith.constant 8 : i32
    %68 = arith.muli %c2_i32, %c8_i32_23 : i32
    %69 = tpu.assume_multiple %68, 8 : i32
    %70 = arith.index_cast %69 : i32 to index
    %c0_24 = arith.constant 0 : index
    %71 = vector.load %arg8[%70, %c0_24] : memref<64x128xf32, #tpu.memory_space<vmem>>, vector<8x128xf32>
    %cst_25 = arith.constant dense<0.000000e+00> : vector<8x128xf32>
    %72 = tpu.matmul %67, %8, %cst_25 {dimension_numbers = #tpu.dot_dimension_numbers<[1], [0], [0], [1], [0, 0, 1, 1], [], []>} : vector<8x32xf32>, vector<32x128xf32>, vector<8x128xf32> -> vector<8x128xf32>
    %73 = arith.addf %71, %72 : vector<8x128xf32>
    %74 = arith.negf %73 : vector<8x128xf32>
    %75 = math.exp %74 : vector<8x128xf32>
    %cst_26 = arith.constant 1.000000e+00 : f32
    %76 = vector.broadcast %cst_26 : f32 to vector<8x128xf32>
    %77 = arith.addf %76, %75 : vector<8x128xf32>
    %78 = arith.divf %76, %77 : vector<8x128xf32>
    %79 = vector.broadcast %14 : vector<1x128xf32> to vector<8x128xf32>
    %80 = arith.mulf %78, %79 : vector<8x128xf32>
    %81 = vector.broadcast %17 : vector<1x128xf32> to vector<8x128xf32>
    %82 = arith.addf %80, %81 : vector<8x128xf32>
    %83 = vector.extract_strided_slice %82 {offsets = [0, 0], sizes = [8, 32], strides = [1, 1]} : vector<8x128xf32> to vector<8x32xf32>
    %84 = vector.extract_strided_slice %82 {offsets = [0, 32], sizes = [8, 32], strides = [1, 1]} : vector<8x128xf32> to vector<8x32xf32>
    %85 = vector.extract_strided_slice %82 {offsets = [0, 64], sizes = [8, 32], strides = [1, 1]} : vector<8x128xf32> to vector<8x32xf32>
    %86 = vector.extract_strided_slice %82 {offsets = [0, 96], sizes = [8, 32], strides = [1, 1]} : vector<8x128xf32> to vector<8x32xf32>
    %87 = arith.mulf %84, %65 : vector<8x32xf32>
    %88 = arith.mulf %83, %86 : vector<8x32xf32>
    %89 = arith.addf %87, %88 : vector<8x32xf32>
    %90 = math.tanh %89 : vector<8x32xf32>
    %91 = arith.mulf %85, %90 : vector<8x32xf32>
    %c3_i32 = arith.constant 3 : i32
    %c8_i32_27 = arith.constant 8 : i32
    %92 = arith.muli %c3_i32, %c8_i32_27 : i32
    %93 = tpu.assume_multiple %92, 8 : i32
    %94 = arith.index_cast %93 : i32 to index
    %c0_28 = arith.constant 0 : index
    %95 = vector.load %arg8[%94, %c0_28] : memref<64x128xf32, #tpu.memory_space<vmem>>, vector<8x128xf32>
    %cst_29 = arith.constant dense<0.000000e+00> : vector<8x128xf32>
    %96 = tpu.matmul %91, %8, %cst_29 {dimension_numbers = #tpu.dot_dimension_numbers<[1], [0], [0], [1], [0, 0, 1, 1], [], []>} : vector<8x32xf32>, vector<32x128xf32>, vector<8x128xf32> -> vector<8x128xf32>
    %97 = arith.addf %95, %96 : vector<8x128xf32>
    %98 = arith.negf %97 : vector<8x128xf32>
    %99 = math.exp %98 : vector<8x128xf32>
    %cst_30 = arith.constant 1.000000e+00 : f32
    %100 = vector.broadcast %cst_30 : f32 to vector<8x128xf32>
    %101 = arith.addf %100, %99 : vector<8x128xf32>
    %102 = arith.divf %100, %101 : vector<8x128xf32>
    %103 = vector.broadcast %14 : vector<1x128xf32> to vector<8x128xf32>
    %104 = arith.mulf %102, %103 : vector<8x128xf32>
    %105 = vector.broadcast %17 : vector<1x128xf32> to vector<8x128xf32>
    %106 = arith.addf %104, %105 : vector<8x128xf32>
    %107 = vector.extract_strided_slice %106 {offsets = [0, 0], sizes = [8, 32], strides = [1, 1]} : vector<8x128xf32> to vector<8x32xf32>
    %108 = vector.extract_strided_slice %106 {offsets = [0, 32], sizes = [8, 32], strides = [1, 1]} : vector<8x128xf32> to vector<8x32xf32>
    %109 = vector.extract_strided_slice %106 {offsets = [0, 64], sizes = [8, 32], strides = [1, 1]} : vector<8x128xf32> to vector<8x32xf32>
    %110 = vector.extract_strided_slice %106 {offsets = [0, 96], sizes = [8, 32], strides = [1, 1]} : vector<8x128xf32> to vector<8x32xf32>
    %111 = arith.mulf %108, %89 : vector<8x32xf32>
    %112 = arith.mulf %107, %110 : vector<8x32xf32>
    %113 = arith.addf %111, %112 : vector<8x32xf32>
    %114 = math.tanh %113 : vector<8x32xf32>
    %115 = arith.mulf %109, %114 : vector<8x32xf32>
    %c4_i32 = arith.constant 4 : i32
    %c8_i32_31 = arith.constant 8 : i32
    %116 = arith.muli %c4_i32, %c8_i32_31 : i32
    %117 = tpu.assume_multiple %116, 8 : i32
    %118 = arith.index_cast %117 : i32 to index
    %c0_32 = arith.constant 0 : index
    %119 = vector.load %arg8[%118, %c0_32] : memref<64x128xf32, #tpu.memory_space<vmem>>, vector<8x128xf32>
    %cst_33 = arith.constant dense<0.000000e+00> : vector<8x128xf32>
    %120 = tpu.matmul %115, %8, %cst_33 {dimension_numbers = #tpu.dot_dimension_numbers<[1], [0], [0], [1], [0, 0, 1, 1], [], []>} : vector<8x32xf32>, vector<32x128xf32>, vector<8x128xf32> -> vector<8x128xf32>
    %121 = arith.addf %119, %120 : vector<8x128xf32>
    %122 = arith.negf %121 : vector<8x128xf32>
    %123 = math.exp %122 : vector<8x128xf32>
    %cst_34 = arith.constant 1.000000e+00 : f32
    %124 = vector.broadcast %cst_34 : f32 to vector<8x128xf32>
    %125 = arith.addf %124, %123 : vector<8x128xf32>
    %126 = arith.divf %124, %125 : vector<8x128xf32>
    %127 = vector.broadcast %14 : vector<1x128xf32> to vector<8x128xf32>
    %128 = arith.mulf %126, %127 : vector<8x128xf32>
    %129 = vector.broadcast %17 : vector<1x128xf32> to vector<8x128xf32>
    %130 = arith.addf %128, %129 : vector<8x128xf32>
    %131 = vector.extract_strided_slice %130 {offsets = [0, 0], sizes = [8, 32], strides = [1, 1]} : vector<8x128xf32> to vector<8x32xf32>
    %132 = vector.extract_strided_slice %130 {offsets = [0, 32], sizes = [8, 32], strides = [1, 1]} : vector<8x128xf32> to vector<8x32xf32>
    %133 = vector.extract_strided_slice %130 {offsets = [0, 64], sizes = [8, 32], strides = [1, 1]} : vector<8x128xf32> to vector<8x32xf32>
    %134 = vector.extract_strided_slice %130 {offsets = [0, 96], sizes = [8, 32], strides = [1, 1]} : vector<8x128xf32> to vector<8x32xf32>
    %135 = arith.mulf %132, %113 : vector<8x32xf32>
    %136 = arith.mulf %131, %134 : vector<8x32xf32>
    %137 = arith.addf %135, %136 : vector<8x32xf32>
    %138 = math.tanh %137 : vector<8x32xf32>
    %139 = arith.mulf %133, %138 : vector<8x32xf32>
    %c5_i32 = arith.constant 5 : i32
    %c8_i32_35 = arith.constant 8 : i32
    %140 = arith.muli %c5_i32, %c8_i32_35 : i32
    %141 = tpu.assume_multiple %140, 8 : i32
    %142 = arith.index_cast %141 : i32 to index
    %c0_36 = arith.constant 0 : index
    %143 = vector.load %arg8[%142, %c0_36] : memref<64x128xf32, #tpu.memory_space<vmem>>, vector<8x128xf32>
    %cst_37 = arith.constant dense<0.000000e+00> : vector<8x128xf32>
    %144 = tpu.matmul %139, %8, %cst_37 {dimension_numbers = #tpu.dot_dimension_numbers<[1], [0], [0], [1], [0, 0, 1, 1], [], []>} : vector<8x32xf32>, vector<32x128xf32>, vector<8x128xf32> -> vector<8x128xf32>
    %145 = arith.addf %143, %144 : vector<8x128xf32>
    %146 = arith.negf %145 : vector<8x128xf32>
    %147 = math.exp %146 : vector<8x128xf32>
    %cst_38 = arith.constant 1.000000e+00 : f32
    %148 = vector.broadcast %cst_38 : f32 to vector<8x128xf32>
    %149 = arith.addf %148, %147 : vector<8x128xf32>
    %150 = arith.divf %148, %149 : vector<8x128xf32>
    %151 = vector.broadcast %14 : vector<1x128xf32> to vector<8x128xf32>
    %152 = arith.mulf %150, %151 : vector<8x128xf32>
    %153 = vector.broadcast %17 : vector<1x128xf32> to vector<8x128xf32>
    %154 = arith.addf %152, %153 : vector<8x128xf32>
    %155 = vector.extract_strided_slice %154 {offsets = [0, 0], sizes = [8, 32], strides = [1, 1]} : vector<8x128xf32> to vector<8x32xf32>
    %156 = vector.extract_strided_slice %154 {offsets = [0, 32], sizes = [8, 32], strides = [1, 1]} : vector<8x128xf32> to vector<8x32xf32>
    %157 = vector.extract_strided_slice %154 {offsets = [0, 64], sizes = [8, 32], strides = [1, 1]} : vector<8x128xf32> to vector<8x32xf32>
    %158 = vector.extract_strided_slice %154 {offsets = [0, 96], sizes = [8, 32], strides = [1, 1]} : vector<8x128xf32> to vector<8x32xf32>
    %159 = arith.mulf %156, %137 : vector<8x32xf32>
    %160 = arith.mulf %155, %158 : vector<8x32xf32>
    %161 = arith.addf %159, %160 : vector<8x32xf32>
    %162 = math.tanh %161 : vector<8x32xf32>
    %163 = arith.mulf %157, %162 : vector<8x32xf32>
    %c6_i32 = arith.constant 6 : i32
    %c8_i32_39 = arith.constant 8 : i32
    %164 = arith.muli %c6_i32, %c8_i32_39 : i32
    %165 = tpu.assume_multiple %164, 8 : i32
    %166 = arith.index_cast %165 : i32 to index
    %c0_40 = arith.constant 0 : index
    %167 = vector.load %arg8[%166, %c0_40] : memref<64x128xf32, #tpu.memory_space<vmem>>, vector<8x128xf32>
    %cst_41 = arith.constant dense<0.000000e+00> : vector<8x128xf32>
    %168 = tpu.matmul %163, %8, %cst_41 {dimension_numbers = #tpu.dot_dimension_numbers<[1], [0], [0], [1], [0, 0, 1, 1], [], []>} : vector<8x32xf32>, vector<32x128xf32>, vector<8x128xf32> -> vector<8x128xf32>
    %169 = arith.addf %167, %168 : vector<8x128xf32>
    %170 = arith.negf %169 : vector<8x128xf32>
    %171 = math.exp %170 : vector<8x128xf32>
    %cst_42 = arith.constant 1.000000e+00 : f32
    %172 = vector.broadcast %cst_42 : f32 to vector<8x128xf32>
    %173 = arith.addf %172, %171 : vector<8x128xf32>
    %174 = arith.divf %172, %173 : vector<8x128xf32>
    %175 = vector.broadcast %14 : vector<1x128xf32> to vector<8x128xf32>
    %176 = arith.mulf %174, %175 : vector<8x128xf32>
    %177 = vector.broadcast %17 : vector<1x128xf32> to vector<8x128xf32>
    %178 = arith.addf %176, %177 : vector<8x128xf32>
    %179 = vector.extract_strided_slice %178 {offsets = [0, 0], sizes = [8, 32], strides = [1, 1]} : vector<8x128xf32> to vector<8x32xf32>
    %180 = vector.extract_strided_slice %178 {offsets = [0, 32], sizes = [8, 32], strides = [1, 1]} : vector<8x128xf32> to vector<8x32xf32>
    %181 = vector.extract_strided_slice %178 {offsets = [0, 64], sizes = [8, 32], strides = [1, 1]} : vector<8x128xf32> to vector<8x32xf32>
    %182 = vector.extract_strided_slice %178 {offsets = [0, 96], sizes = [8, 32], strides = [1, 1]} : vector<8x128xf32> to vector<8x32xf32>
    %183 = arith.mulf %180, %161 : vector<8x32xf32>
    %184 = arith.mulf %179, %182 : vector<8x32xf32>
    %185 = arith.addf %183, %184 : vector<8x32xf32>
    %186 = math.tanh %185 : vector<8x32xf32>
    %187 = arith.mulf %181, %186 : vector<8x32xf32>
    %c7_i32 = arith.constant 7 : i32
    %c8_i32_43 = arith.constant 8 : i32
    %188 = arith.muli %c7_i32, %c8_i32_43 : i32
    %189 = tpu.assume_multiple %188, 8 : i32
    %190 = arith.index_cast %189 : i32 to index
    %c0_44 = arith.constant 0 : index
    %191 = vector.load %arg8[%190, %c0_44] : memref<64x128xf32, #tpu.memory_space<vmem>>, vector<8x128xf32>
    %cst_45 = arith.constant dense<0.000000e+00> : vector<8x128xf32>
    %192 = tpu.matmul %187, %8, %cst_45 {dimension_numbers = #tpu.dot_dimension_numbers<[1], [0], [0], [1], [0, 0, 1, 1], [], []>} : vector<8x32xf32>, vector<32x128xf32>, vector<8x128xf32> -> vector<8x128xf32>
    %193 = arith.addf %191, %192 : vector<8x128xf32>
    %194 = arith.negf %193 : vector<8x128xf32>
    %195 = math.exp %194 : vector<8x128xf32>
    %cst_46 = arith.constant 1.000000e+00 : f32
    %196 = vector.broadcast %cst_46 : f32 to vector<8x128xf32>
    %197 = arith.addf %196, %195 : vector<8x128xf32>
    %198 = arith.divf %196, %197 : vector<8x128xf32>
    %199 = vector.broadcast %14 : vector<1x128xf32> to vector<8x128xf32>
    %200 = arith.mulf %198, %199 : vector<8x128xf32>
    %201 = vector.broadcast %17 : vector<1x128xf32> to vector<8x128xf32>
    %202 = arith.addf %200, %201 : vector<8x128xf32>
    %203 = vector.extract_strided_slice %202 {offsets = [0, 0], sizes = [8, 32], strides = [1, 1]} : vector<8x128xf32> to vector<8x32xf32>
    %204 = vector.extract_strided_slice %202 {offsets = [0, 32], sizes = [8, 32], strides = [1, 1]} : vector<8x128xf32> to vector<8x32xf32>
    %205 = vector.extract_strided_slice %202 {offsets = [0, 64], sizes = [8, 32], strides = [1, 1]} : vector<8x128xf32> to vector<8x32xf32>
    %206 = vector.extract_strided_slice %202 {offsets = [0, 96], sizes = [8, 32], strides = [1, 1]} : vector<8x128xf32> to vector<8x32xf32>
    %207 = arith.mulf %204, %185 : vector<8x32xf32>
    %208 = arith.mulf %203, %206 : vector<8x32xf32>
    %209 = arith.addf %207, %208 : vector<8x32xf32>
    %210 = math.tanh %209 : vector<8x32xf32>
    %211 = arith.mulf %205, %210 : vector<8x32xf32>
    %c8_i32_47 = arith.constant 8 : i32
    %c0_48 = arith.constant 0 : index
    %c0_49 = arith.constant 0 : index
    %212 = vector.load %arg5[%c0_48, %c0_49] : memref<1x32xf32, #tpu.memory_space<vmem>>, vector<1x32xf32>
    %213 = vector.broadcast %212 : vector<1x32xf32> to vector<8x32xf32>
    %214 = arith.mulf %211, %213 : vector<8x32xf32>
    %cst_50 = arith.constant dense<0.000000e+00> : vector<8xf32>
    %215 = vector.multi_reduction <add>, %214, %cst_50 [1] : vector<8x32xf32> to vector<8xf32>
    %216 = vector.shape_cast %215 : vector<8xf32> to vector<8x1xf32>
    %c0_51 = arith.constant 0 : index
    %c0_52 = arith.constant 0 : index
    %217 = vector.load %arg6[%c0_51, %c0_52] : memref<1x1xf32, #tpu.memory_space<vmem>>, vector<1x1xf32>
    %218 = vector.broadcast %217 : vector<1x1xf32> to vector<8x1xf32>
    %219 = arith.addf %216, %218 : vector<8x1xf32>
    %c0_53 = arith.constant 0 : index
    %c0_54 = arith.constant 0 : index
    %220 = vector.load %arg7[%c0_53, %c0_54] : memref<8x1xf32, #tpu.memory_space<vmem>>, vector<8x1xf32>
    tpu.vector_store %arg7[%c0_53, %c0_54], %219 {strides = array<i32>} : memref<8x1xf32, #tpu.memory_space<vmem>>, vector<8x1xf32>,
    return
  }
  func.func @transform_0(%arg0: i32) -> (i32, i32, i32) {
    %c0_i32 = arith.constant 0 : i32
    %c0_i32_0 = arith.constant 0 : i32
    %c0_i32_1 = arith.constant 0 : i32
    return %arg0, %c0_i32, %c0_i32_0 : i32, i32, i32
  }
  func.func @transform_1(%arg0: i32) -> (i32, i32) {
    %c0_i32 = arith.constant 0 : i32
    %c0_i32_0 = arith.constant 0 : i32
    %c0_i32_1 = arith.constant 0 : i32
    return %c0_i32, %c0_i32_0 : i32, i32
  }
  func.func @transform_2(%arg0: i32) -> (i32, i32) {
    %c0_i32 = arith.constant 0 : i32
    %c0_i32_0 = arith.constant 0 : i32
    %c0_i32_1 = arith.constant 0 : i32
    return %c0_i32, %c0_i32_0 : i32, i32
  }
  func.func @transform_3(%arg0: i32) -> (i32, i32) {
    %c0_i32 = arith.constant 0 : i32
    %c0_i32_0 = arith.constant 0 : i32
    %c0_i32_1 = arith.constant 0 : i32
    return %c0_i32, %c0_i32_0 : i32, i32
  }
  func.func @transform_4(%arg0: i32) -> (i32, i32) {
    %c0_i32 = arith.constant 0 : i32
    %c0_i32_0 = arith.constant 0 : i32
    %c0_i32_1 = arith.constant 0 : i32
    return %c0_i32, %c0_i32_0 : i32, i32
  }
  func.func @transform_5(%arg0: i32) -> (i32, i32) {
    %c0_i32 = arith.constant 0 : i32
    %c0_i32_0 = arith.constant 0 : i32
    %c0_i32_1 = arith.constant 0 : i32
    return %c0_i32, %c0_i32_0 : i32, i32
  }
  func.func @transform_6(%arg0: i32) -> (i32, i32) {
    %c0_i32 = arith.constant 0 : i32
    %c0_i32_0 = arith.constant 0 : i32
    return %arg0, %c0_i32 : i32, i32
  }
}

</mosaic_0001>

<llo_original>
// kernel: tpu_custom_call.1
$region0: #{tpu_custom_call.1}
  #allocation0 [shape = 'u32[]', space=smem, size = 0x4, offset = 0x4, fixed_abs, tag = 'smem constant byte address 0x4 - core index']
  #allocation1 [shape = 'u32[144,128]{1,0:T(1,128)}', space=vmem, size = 0x12000, scoped, tag = 'internal scratch']
  #allocation2 [shape = 'f32[64,128]{1,0:T(8,128)}', space=vmem, size = 0x8000, scoped, tag = 'scratch operand']
  #allocation3 [shape = 'f32[1,1]{1,0:T(1,128)S(1)}', space=vmem, size = 0x200, scoped, tag = 'scoped memory for tpu_custom_call.1']
  %s0 = inlined_call_operand.vmem [shape: f32[1,64,4], index: 0, kind: input, shape index: {}]
  %s1 = inlined_call_operand.vmem [shape: f32[4,128], index: 1, kind: input, shape index: {}]
  %s2 = inlined_call_operand.vmem [shape: f32[32,128], index: 2, kind: input, shape index: {}]
  %s3 = inlined_call_operand.vmem [shape: f32[1,128], index: 3, kind: input, shape index: {}]
  %s4 = inlined_call_operand.vmem [shape: f32[1,32], index: 4, kind: input, shape index: {}]
  %s5 = inlined_call_operand.<no memory space> [shape: f32[1,1], index: 5, kind: input, shape index: {}]
  %s6 = inlined_call_operand.vmem [shape: f32[8,1], index: 6, kind: output, shape index: {}]
  %s7 = sld [smem:[#allocation0]]
  $region34: #{tpu_custom_call.1} parent=0
    _
  %s9 = ssub.s32 1, %s7
  %s10 = scalar_select 0, %s9, %s7
  %v11 = vstv %s5
  %12 = vst [vmem:[#allocation3] sm:$0x1] %v11
  // Predicated region
  $region2: #{tpu_custom_call.1} parent=0 // pred_check
    _
  $region3: #{tpu_custom_call.1} parent=0 // pred_check_branch
    %14 = sbr.rel (0) target = $region5
  $region4: #{tpu_custom_call.1} parent=0 // pred_region
    _
  $region5: #{tpu_custom_call.1} parent=0 // pred_fallthru
    _
  // Predicated region
  $region6: #{tpu_custom_call.1} parent=0 // pred_check
    _
  $region7: #{tpu_custom_call.1} parent=0 // pred_check_branch
    %16 = sbr.rel (0) target = $region9
  $region8: #{tpu_custom_call.1} parent=0 // pred_region
    _
  $region9: #{tpu_custom_call.1} parent=0 // pred_fallthru
    _
  // Predicated region
  $region10: #{tpu_custom_call.1} parent=0 // pred_check
    _
  $region11: #{tpu_custom_call.1} parent=0 // pred_check_branch
    %18 = sbr.rel (0) target = $region13
  $region12: #{tpu_custom_call.1} parent=0 // pred_region
    _
  $region13: #{tpu_custom_call.1} parent=0 // pred_fallthru
    _
  // Predicated region
  $region14: #{tpu_custom_call.1} parent=0 // pred_check
    _
  $region15: #{tpu_custom_call.1} parent=0 // pred_check_branch
    %20 = sbr.rel (0) target = $region17
  $region16: #{tpu_custom_call.1} parent=0 // pred_region
    _
  $region17: #{tpu_custom_call.1} parent=0 // pred_fallthru
    _
  // Predicated region
  $region18: #{tpu_custom_call.1} parent=0 // pred_check
    _
  $region19: #{tpu_custom_call.1} parent=0 // pred_check_branch
    %22 = sbr.rel (0) target = $region21
  $region20: #{tpu_custom_call.1} parent=0 // pred_region
    _
  $region21: #{tpu_custom_call.1} parent=0 // pred_fallthru
    _
  // Predicated region
  $region22: #{tpu_custom_call.1} parent=0 // pred_check
    _
  $region23: #{tpu_custom_call.1} parent=0 // pred_check_branch
    %24 = sbr.rel (0) target = $region25
  $region24: #{tpu_custom_call.1} parent=0 // pred_region
    _
  $region25: #{tpu_custom_call.1} parent=0 // pred_fallthru
    _
  %v25 = vld [vmem:[%s0] sm:$0xff]
  %v26 = vld [vmem:[%s0 + $0x8] sm:$0xff]
  %v27 = vld [vmem:[%s0 + $0x10] sm:$0xff]
  %v28 = vld [vmem:[%s0 + $0x18] sm:$0xff]
  %v29 = vld [vmem:[%s0 + $0x20] sm:$0xff]
  %v30 = vld [vmem:[%s0 + $0x28] sm:$0xff]
  %v31 = vld [vmem:[%s0 + $0x30] sm:$0xff]
  %v32 = vld [vmem:[%s0 + $0x38] sm:$0xff]
  %v33 = vld [vmem:[%s1] sm:$0xf]
  %v34 = vld [vmem:[%s3] sm:$0x1]
  %v36 = vlaneseq
  %v37 = vshrl.u32 %v36, 7
  %v38 = vsub.s32 0, %v37
  %v39 = vrot.slane %v34, %v38
  %vm41 = vcmask 31744
  %v43 = vsel %vm41, %v25, 0
  %v46 = vsel %vm41, %v26, 0
  %v49 = vsel %vm41, %v27, 0
  %v52 = vsel %vm41, %v28, 0
  %v55 = vsel %vm41, %v29, 0
  %v58 = vsel %vm41, %v30, 0
  %v61 = vsel %vm41, %v31, 0
  %v64 = vsel %vm41, %v32, 0
  %vm66 = vcmask 1043456
  %v68 = vsel %vm66, %v33, 0
  %70 = vmatprep.subr.mxu0 0.0
  %71 = vmatpush1.msra.mxu0 %v68
  %72 = vmatprep.subr.mxu0 0.0
  %73 = vmatpush1.msra.mxu0 0.0
  %74 = vmatprep.subr.mxu0 0.0
  %75 = vmatpush1.msra.mxu0 0.0
  %76 = vmatprep.subr.mxu0 0.0
  %77 = vmatpush1.msra.mxu0 0.0
  %78 = vmatprep.subr.mxu0 0.0
  %79 = vmatpush1.msra.mxu0 0.0
  %80 = vmatprep.subr.mxu0 0.0
  %81 = vmatpush1.msra.mxu0 0.0
  %82 = vmatprep.subr.mxu0 0.0
  %83 = vmatpush1.msra.mxu0 0.0
  %84 = vmatprep.subr.mxu0 0.0
  %85 = vmatpush1.msra.mxu0 0.0
  %86 = vmatprep.subr.mxu0 0.0
  %87 = vmatpush1.msra.mxu0 0.0
  %88 = vmatprep.subr.mxu0 0.0
  %89 = vmatpush1.msra.mxu0 0.0
  %90 = vmatprep.subr.mxu0 0.0
  %91 = vmatpush1.msra.mxu0 0.0
  %92 = vmatprep.subr.mxu0 0.0
  %93 = vmatpush1.msra.mxu0 0.0
  %94 = vmatprep.subr.mxu0 0.0
  %95 = vmatpush1.msra.mxu0 0.0
  %96 = vmatprep.subr.mxu0 0.0
  %97 = vmatpush1.msra.mxu0 0.0
  %98 = vmatprep.subr.mxu0 0.0
  %99 = vmatpush1.msra.mxu0 0.0
  %100 = vmatprep.subr.mxu0 0.0
  %101 = vmatpush1.msra.mxu0 0.0
  %102 = vmatprep.subr.mxu0 0.0
  %103 = vmatpush1.msra.mxu0 0.0
  %104 = vmatprep.subr.mxu0 0.0
  %105 = vmatpush1.msra.mxu0 0.0
  %106 = vmatprep.subr.mxu0 0.0
  %107 = vmatpush1.msra.mxu0 0.0
  %108 = vmatprep.subr.mxu0 0.0
  %109 = vmatpush1.msra.mxu0 0.0
  %110 = vmatprep.subr.mxu0 0.0
  %111 = vmatpush1.msra.mxu0 0.0
  %112 = vmatprep.subr.mxu0 0.0
  %113 = vmatpush1.msra.mxu0 0.0
  %114 = vmatprep.subr.mxu0 0.0
  %115 = vmatpush1.msra.mxu0 0.0
  %116 = vmatprep.subr.mxu0 0.0
  %117 = vmatpush1.msra.mxu0 0.0
  %118 = vmatprep.subr.mxu0 0.0
  %119 = vmatpush1.msra.mxu0 0.0
  %120 = vmatprep.subr.mxu0 0.0
  %121 = vmatpush1.msra.mxu0 0.0
  %122 = vmatprep.subr.mxu0 0.0
  %123 = vmatpush1.msra.mxu0 0.0
  %124 = vmatprep.subr.mxu0 0.0
  %125 = vmatpush1.msra.mxu0 0.0
  %126 = vmatprep.subr.mxu0 0.0
  %127 = vmatpush1.msra.mxu0 0.0
  %128 = vmatprep.subr.mxu0 0.0
  %129 = vmatpush1.msra.mxu0 0.0
  %130 = vmatprep.subr.mxu0 0.0
  %131 = vmatpush1.msra.mxu0 0.0
  %132 = vmatprep.subr.mxu0 0.0
  %133 = vmatpush1.msra.mxu0 0.0
  %134 = vmatprep.mubr.f32.mxu0 0.0
  %135 = vmatmul.mubr.f32.gmra.mrb[0].mxu0 %v43
  %v136 = vpop.f32.mrb[0].mxu0
  %v137 = vadd.f32 %v39, %v136
  %v138 = vpop.f32.mrb[0].mxu0
  %139 = vmatprep.mubr.f32.mxu0 0.0
  %140 = vmatmul.mubr.f32.gmra.mrb[0].mxu0 %v46
  %v141 = vpop.f32.mrb[0].mxu0
  %v142 = vadd.f32 %v39, %v141
  %v143 = vpop.f32.mrb[0].mxu0
  %144 = vmatprep.mubr.f32.mxu0 0.0
  %145 = vmatmul.mubr.f32.gmra.mrb[0].mxu0 %v49
  %v146 = vpop.f32.mrb[0].mxu0
  %v147 = vadd.f32 %v39, %v146
  %v148 = vpop.f32.mrb[0].mxu0
  %149 = vmatprep.mubr.f32.mxu0 0.0
  %150 = vmatmul.mubr.f32.gmra.mrb[0].mxu0 %v52
  %v151 = vpop.f32.mrb[0].mxu0
  %v152 = vadd.f32 %v39, %v151
  %v153 = vpop.f32.mrb[0].mxu0
  %154 = vmatprep.mubr.f32.mxu0 0.0
  %155 = vmatmul.mubr.f32.gmra.mrb[0].mxu0 %v55
  %v156 = vpop.f32.mrb[0].mxu0
  %v157 = vadd.f32 %v39, %v156
  %v158 = vpop.f32.mrb[0].mxu0
  %159 = vmatprep.mubr.f32.mxu0 0.0
  %160 = vmatmul.mubr.f32.gmra.mrb[0].mxu0 %v58
  %v161 = vpop.f32.mrb[0].mxu0
  %v162 = vadd.f32 %v39, %v161
  %v163 = vpop.f32.mrb[0].mxu0
  %164 = vmatprep.mubr.f32.mxu0 0.0
  %165 = vmatmul.mubr.f32.gmra.mrb[0].mxu0 %v61
  %v166 = vpop.f32.mrb[0].mxu0
  %v167 = vadd.f32 %v39, %v166
  %v168 = vpop.f32.mrb[0].mxu0
  %169 = vmatprep.mubr.f32.mxu0 0.0
  %170 = vmatmul.mubr.f32.gmra.mrb[0].mxu0 %v64
  %v171 = vpop.f32.mrb[0].mxu0
  %v172 = vadd.f32 %v39, %v171
  %v173 = vpop.f32.mrb[0].mxu0
  %174 = vdwg.mxu0
  %175 = vst [vmem:[#allocation2] sm:$0xff] %v137
  %176 = vst [vmem:[#allocation2 + $0x8] sm:$0xff] %v142
  %177 = vst [vmem:[#allocation2 + $0x10] sm:$0xff] %v147
  %178 = vst [vmem:[#allocation2 + $0x18] sm:$0xff] %v152
  %179 = vst [vmem:[#allocation2 + $0x20] sm:$0xff] %v157
  %180 = vst [vmem:[#allocation2 + $0x28] sm:$0xff] %v162
  %181 = vst [vmem:[#allocation2 + $0x30] sm:$0xff] %v167
  %182 = vst [vmem:[#allocation2 + $0x38] sm:$0xff] %v172
  %v183 = vld [vmem:[%s2] sm:$0xff]
  %v184 = vld [vmem:[%s2 + $0x8] sm:$0xff]
  %v185 = vld [vmem:[%s2 + $0x10] sm:$0xff]
  %v186 = vld [vmem:[%s2 + $0x18] sm:$0xff]
  %v187 = vlaneseq
  %v188 = vand.u32 %v187, 127
  %vm189 = vcmp.ge.s32.totalorder %v188, 96
  %v190 = vsel %vm189, 2.0, 1.0
  %v191 = vsel %vm189, -1.0, 0.0
  %v192 = vld [vmem:[#allocation2] sm:$0xff]
  %vm193 = vcmask 261120
  %v195 = vsel %vm193, 0.0, 0
  %197 = vmatprep.subr.mxu0 0.0
  %198 = vmatpush1.msra.mxu0 %v183
  %199 = vmatprep.subr.mxu0 0.0
  %200 = vmatpush1.msra.mxu0 %v184
  %201 = vmatprep.subr.mxu0 0.0
  %202 = vmatpush1.msra.mxu0 %v185
  %203 = vmatprep.subr.mxu0 0.0
  %204 = vmatpush1.msra.mxu0 %v186
  %205 = vmatprep.subr.mxu0 0.0
  %206 = vmatpush1.msra.mxu0 0.0
  %207 = vmatprep.subr.mxu0 0.0
  %208 = vmatpush1.msra.mxu0 0.0
  %209 = vmatprep.subr.mxu0 0.0
  %210 = vmatpush1.msra.mxu0 0.0
  %211 = vmatprep.subr.mxu0 0.0
  %212 = vmatpush1.msra.mxu0 0.0
  %213 = vmatprep.subr.mxu0 0.0
  %214 = vmatpush1.msra.mxu0 0.0
  %215 = vmatprep.subr.mxu0 0.0
  %216 = vmatpush1.msra.mxu0 0.0
  %217 = vmatprep.subr.mxu0 0.0
  %218 = vmatpush1.msra.mxu0 0.0
  %219 = vmatprep.subr.mxu0 0.0
  %220 = vmatpush1.msra.mxu0 0.0
  %221 = vmatprep.subr.mxu0 0.0
  %222 = vmatpush1.msra.mxu0 0.0
  %223 = vmatprep.subr.mxu0 0.0
  %224 = vmatpush1.msra.mxu0 0.0
  %225 = vmatprep.subr.mxu0 0.0
  %226 = vmatpush1.msra.mxu0 0.0
  %227 = vmatprep.subr.mxu0 0.0
  %228 = vmatpush1.msra.mxu0 0.0
  %229 = vmatprep.subr.mxu0 0.0
  %230 = vmatpush1.msra.mxu0 0.0
  %231 = vmatprep.subr.mxu0 0.0
  %232 = vmatpush1.msra.mxu0 0.0
  %233 = vmatprep.subr.mxu0 0.0
  %234 = vmatpush1.msra.mxu0 0.0
  %235 = vmatprep.subr.mxu0 0.0
  %236 = vmatpush1.msra.mxu0 0.0
  %237 = vmatprep.subr.mxu0 0.0
  %238 = vmatpush1.msra.mxu0 0.0
  %239 = vmatprep.subr.mxu0 0.0
  %240 = vmatpush1.msra.mxu0 0.0
  %241 = vmatprep.subr.mxu0 0.0
  %242 = vmatpush1.msra.mxu0 0.0
  %243 = vmatprep.subr.mxu0 0.0
  %244 = vmatpush1.msra.mxu0 0.0
  %245 = vmatprep.subr.mxu0 0.0
  %246 = vmatpush1.msra.mxu0 0.0
  %247 = vmatprep.subr.mxu0 0.0
  %248 = vmatpush1.msra.mxu0 0.0
  %249 = vmatprep.subr.mxu0 0.0
  %250 = vmatpush1.msra.mxu0 0.0
  %251 = vmatprep.subr.mxu0 0.0
  %252 = vmatpush1.msra.mxu0 0.0
  %253 = vmatprep.subr.mxu0 0.0
  %254 = vmatpush1.msra.mxu0 0.0
  %255 = vmatprep.subr.mxu0 0.0
  %256 = vmatpush1.msra.mxu0 0.0
  %257 = vmatprep.subr.mxu0 0.0
  %258 = vmatpush1.msra.mxu0 0.0
  %259 = vmatprep.subr.mxu0 0.0
  %260 = vmatpush1.msra.mxu0 0.0
  %261 = vmatprep.mubr.f32.mxu0 0.0
  %262 = vmatmul.mubr.f32.gmra.mrb[0].mxu0 %v195
  %v263 = vpop.f32.mrb[0].mxu0
  %v264 = vadd.f32 0.0, %v263
  %v265 = vpop.f32.mrb[0].mxu0
  %266 = vdwg.mxu0
  %v267 = vadd.f32 %v192, %v264
  %v268 = vxor.u32 %v267, 2147483648
  %v269 = vmul.f32 %v268, 1.442695
  %v270 = vpow.pop %v269
  %v271 = vadd.f32 %v270, 1.0
  %v272 = vrcp.pop %v271
  %v273 = vmul.f32 1.0, %v272
  %v274 = vmul.f32 %v273, %v190
  %v275 = vadd.f32 %v274, %v191
  %v276 = vmul.f32 %v275, 0.0
  %278 = vrot.lane.b32.xlu0 %v275, 32
  %v279 = vpop.permute.xlu0 %278
  %v281 = vmul.f32 %v275, %v279
  %283 = vrot.lane.b32.xlu0 %v281, 32
  %v284 = vpop.permute.xlu0 %283
  %v286 = vadd.f32 %v276, %v284
  %v287 = vtanh.pop %v286
  %289 = vrot.lane.b32.xlu0 %v287, 32
  %v290 = vpop.permute.xlu0 %289
  %v292 = vmul.f32 %v275, %v290
  %s293 = scalar_lea.vmem [#allocation2], 8
  %v294 = vld [vmem:[%s293] sm:$0xff]
  %296 = vrot.lane.b32.xlu0 %v292, 64
  %v297 = vpop.permute.xlu0 %296
  %v298 = vsel %vm193, %v297, 0
  %300 = vmatprep.subr.mxu0 0.0
  %301 = vmatpush1.msra.mxu0 %v183
  %302 = vmatprep.subr.mxu0 0.0
  %303 = vmatpush1.msra.mxu0 %v184
  %304 = vmatprep.subr.mxu0 0.0
  %305 = vmatpush1.msra.mxu0 %v185
  %306 = vmatprep.subr.mxu0 0.0
  %307 = vmatpush1.msra.mxu0 %v186
  %308 = vmatprep.subr.mxu0 0.0
  %309 = vmatpush1.msra.mxu0 0.0
  %310 = vmatprep.subr.mxu0 0.0
  %311 = vmatpush1.msra.mxu0 0.0
  %312 = vmatprep.subr.mxu0 0.0
  %313 = vmatpush1.msra.mxu0 0.0
  %314 = vmatprep.subr.mxu0 0.0
  %315 = vmatpush1.msra.mxu0 0.0
  %316 = vmatprep.subr.mxu0 0.0
  %317 = vmatpush1.msra.mxu0 0.0
  %318 = vmatprep.subr.mxu0 0.0
  %319 = vmatpush1.msra.mxu0 0.0
  %320 = vmatprep.subr.mxu0 0.0
  %321 = vmatpush1.msra.mxu0 0.0
  %322 = vmatprep.subr.mxu0 0.0
  %323 = vmatpush1.msra.mxu0 0.0
  %324 = vmatprep.subr.mxu0 0.0
  %325 = vmatpush1.msra.mxu0 0.0
  %326 = vmatprep.subr.mxu0 0.0
  %327 = vmatpush1.msra.mxu0 0.0
  %328 = vmatprep.subr.mxu0 0.0
  %329 = vmatpush1.msra.mxu0 0.0
  %330 = vmatprep.subr.mxu0 0.0
  %331 = vmatpush1.msra.mxu0 0.0
  %332 = vmatprep.subr.mxu0 0.0
  %333 = vmatpush1.msra.mxu0 0.0
  %334 = vmatprep.subr.mxu0 0.0
  %335 = vmatpush1.msra.mxu0 0.0
  %336 = vmatprep.subr.mxu0 0.0
  %337 = vmatpush1.msra.mxu0 0.0
  %338 = vmatprep.subr.mxu0 0.0
  %339 = vmatpush1.msra.mxu0 0.0
  %340 = vmatprep.subr.mxu0 0.0
  %341 = vmatpush1.msra.mxu0 0.0
  %342 = vmatprep.subr.mxu0 0.0
  %343 = vmatpush1.msra.mxu0 0.0
  %344 = vmatprep.subr.mxu0 0.0
  %345 = vmatpush1.msra.mxu0 0.0
  %346 = vmatprep.subr.mxu0 0.0
  %347 = vmatpush1.msra.mxu0 0.0
  %348 = vmatprep.subr.mxu0 0.0
  %349 = vmatpush1.msra.mxu0 0.0
  %350 = vmatprep.subr.mxu0 0.0
  %351 = vmatpush1.msra.mxu0 0.0
  %352 = vmatprep.subr.mxu0 0.0
  %353 = vmatpush1.msra.mxu0 0.0
  %354 = vmatprep.subr.mxu0 0.0
  %355 = vmatpush1.msra.mxu0 0.0
  %356 = vmatprep.subr.mxu0 0.0
  %357 = vmatpush1.msra.mxu0 0.0
  %358 = vmatprep.subr.mxu0 0.0
  %359 = vmatpush1.msra.mxu0 0.0
  %360 = vmatprep.subr.mxu0 0.0
  %361 = vmatpush1.msra.mxu0 0.0
  %362 = vmatprep.subr.mxu0 0.0
  %363 = vmatpush1.msra.mxu0 0.0
  %364 = vmatprep.mubr.f32.mxu0 0.0
  %365 = vmatmul.mubr.f32.gmra.mrb[0].mxu0 %v298
  %v366 = vpop.f32.mrb[0].mxu0
  %v367 = vadd.f32 0.0, %v366
  %v368 = vpop.f32.mrb[0].mxu0
  %369 = vdwg.mxu0
  %v370 = vadd.f32 %v294, %v367
  %v371 = vxor.u32 %v370, 2147483648
  %v372 = vmul.f32 %v371, 1.442695
  %v373 = vpow.pop %v372
  %v374 = vadd.f32 %v373, 1.0
  %v375 = vrcp.pop %v374
  %v376 = vmul.f32 1.0, %v375
  %v377 = vmul.f32 %v376, %v190
  %v378 = vadd.f32 %v377, %v191
  %v379 = vmul.f32 %v378, %v286
  %381 = vrot.lane.b32.xlu0 %v378, 32
  %v382 = vpop.permute.xlu0 %381
  %v384 = vmul.f32 %v378, %v382
  %386 = vrot.lane.b32.xlu0 %v384, 32
  %v387 = vpop.permute.xlu0 %386
  %v389 = vadd.f32 %v379, %v387
  %v390 = vtanh.pop %v389
  %392 = vrot.lane.b32.xlu0 %v390, 32
  %v393 = vpop.permute.xlu0 %392
  %v395 = vmul.f32 %v378, %v393
  %s396 = scalar_lea.vmem [#allocation2], 16
  %v397 = vld [vmem:[%s396] sm:$0xff]
  %399 = vrot.lane.b32.xlu0 %v395, 64
  %v400 = vpop.permute.xlu0 %399
  %v401 = vsel %vm193, %v400, 0
  %403 = vmatprep.subr.mxu0 0.0
  %404 = vmatpush1.msra.mxu0 %v183
  %405 = vmatprep.subr.mxu0 0.0
  %406 = vmatpush1.msra.mxu0 %v184
  %407 = vmatprep.subr.mxu0 0.0
  %408 = vmatpush1.msra.mxu0 %v185
  %409 = vmatprep.subr.mxu0 0.0
  %410 = vmatpush1.msra.mxu0 %v186
  %411 = vmatprep.subr.mxu0 0.0
  %412 = vmatpush1.msra.mxu0 0.0
  %413 = vmatprep.subr.mxu0 0.0
  %414 = vmatpush1.msra.mxu0 0.0
  %415 = vmatprep.subr.mxu0 0.0
  %416 = vmatpush1.msra.mxu0 0.0
  %417 = vmatprep.subr.mxu0 0.0
  %418 = vmatpush1.msra.mxu0 0.0
  %419 = vmatprep.subr.mxu0 0.0
  %420 = vmatpush1.msra.mxu0 0.0
  %421 = vmatprep.subr.mxu0 0.0
  %422 = vmatpush1.msra.mxu0 0.0
  %423 = vmatprep.subr.mxu0 0.0
  %424 = vmatpush1.msra.mxu0 0.0
  %425 = vmatprep.subr.mxu0 0.0
  %426 = vmatpush1.msra.mxu0 0.0
  %427 = vmatprep.subr.mxu0 0.0
  %428 = vmatpush1.msra.mxu0 0.0
  %429 = vmatprep.subr.mxu0 0.0
  %430 = vmatpush1.msra.mxu0 0.0
  %431 = vmatprep.subr.mxu0 0.0
  %432 = vmatpush1.msra.mxu0 0.0
  %433 = vmatprep.subr.mxu0 0.0
  %434 = vmatpush1.msra.mxu0 0.0
  %435 = vmatprep.subr.mxu0 0.0
  %436 = vmatpush1.msra.mxu0 0.0
  %437 = vmatprep.subr.mxu0 0.0
  %438 = vmatpush1.msra.mxu0 0.0
  %439 = vmatprep.subr.mxu0 0.0
  %440 = vmatpush1.msra.mxu0 0.0
  %441 = vmatprep.subr.mxu0 0.0
  %442 = vmatpush1.msra.mxu0 0.0
  %443 = vmatprep.subr.mxu0 0.0
  %444 = vmatpush1.msra.mxu0 0.0
  %445 = vmatprep.subr.mxu0 0.0
  %446 = vmatpush1.msra.mxu0 0.0
  %447 = vmatprep.subr.mxu0 0.0
  %448 = vmatpush1.msra.mxu0 0.0
  %449 = vmatprep.subr.mxu0 0.0
  %450 = vmatpush1.msra.mxu0 0.0
  %451 = vmatprep.subr.mxu0 0.0
  %452 = vmatpush1.msra.mxu0 0.0
  %453 = vmatprep.subr.mxu0 0.0
  %454 = vmatpush1.msra.mxu0 0.0
  %455 = vmatprep.subr.mxu0 0.0
  %456 = vmatpush1.msra.mxu0 0.0
  %457 = vmatprep.subr.mxu0 0.0
  %458 = vmatpush1.msra.mxu0 0.0
  %459 = vmatprep.subr.mxu0 0.0
  %460 = vmatpush1.msra.mxu0 0.0
  %461 = vmatprep.subr.mxu0 0.0
  %462 = vmatpush1.msra.mxu0 0.0
  %463 = vmatprep.subr.mxu0 0.0
  %464 = vmatpush1.msra.mxu0 0.0
  %465 = vmatprep.subr.mxu0 0.0
  %466 = vmatpush1.msra.mxu0 0.0
  %467 = vmatprep.mubr.f32.mxu0 0.0
  %468 = vmatmul.mubr.f32.gmra.mrb[0].mxu0 %v401
  %v469 = vpop.f32.mrb[0].mxu0
  %v470 = vadd.f32 0.0, %v469
  %v471 = vpop.f32.mrb[0].mxu0
  %472 = vdwg.mxu0
  %v473 = vadd.f32 %v397, %v470
  %v474 = vxor.u32 %v473, 2147483648
  %v475 = vmul.f32 %v474, 1.442695
  %v476 = vpow.pop %v475
  %v477 = vadd.f32 %v476, 1.0
  %v478 = vrcp.pop %v477
  %v479 = vmul.f32 1.0, %v478
  %v480 = vmul.f32 %v479, %v190
  %v481 = vadd.f32 %v480, %v191
  %v482 = vmul.f32 %v481, %v389
  %484 = vrot.lane.b32.xlu0 %v481, 32
  %v485 = vpop.permute.xlu0 %484
  %v487 = vmul.f32 %v481, %v485
  %489 = vrot.lane.b32.xlu0 %v487, 32
  %v490 = vpop.permute.xlu0 %489
  %v492 = vadd.f32 %v482, %v490
  %v493 = vtanh.pop %v492
  %495 = vrot.lane.b32.xlu0 %v493, 32
  %v496 = vpop.permute.xlu0 %495
  %v498 = vmul.f32 %v481, %v496
  %s499 = scalar_lea.vmem [#allocation2], 24
  %v500 = vld [vmem:[%s499] sm:$0xff]
  %502 = vrot.lane.b32.xlu0 %v498, 64
  %v503 = vpop.permute.xlu0 %502
  %v504 = vsel %vm193, %v503, 0
  %506 = vmatprep.subr.mxu0 0.0
  %507 = vmatpush1.msra.mxu0 %v183
  %508 = vmatprep.subr.mxu0 0.0
  %509 = vmatpush1.msra.mxu0 %v184
  %510 = vmatprep.subr.mxu0 0.0
  %511 = vmatpush1.msra.mxu0 %v185
  %512 = vmatprep.subr.mxu0 0.0
  %513 = vmatpush1.msra.mxu0 %v186
  %514 = vmatprep.subr.mxu0 0.0
  %515 = vmatpush1.msra.mxu0 0.0
  %516 = vmatprep.subr.mxu0 0.0
  %517 = vmatpush1.msra.mxu0 0.0
  %518 = vmatprep.subr.mxu0 0.0
  %519 = vmatpush1.msra.mxu0 0.0
  %520 = vmatprep.subr.mxu0 0.0
  %521 = vmatpush1.msra.mxu0 0.0
  %522 = vmatprep.subr.mxu0 0.0
  %523 = vmatpush1.msra.mxu0 0.0
  %524 = vmatprep.subr.mxu0 0.0
  %525 = vmatpush1.msra.mxu0 0.0
  %526 = vmatprep.subr.mxu0 0.0
  %527 = vmatpush1.msra.mxu0 0.0
  %528 = vmatprep.subr.mxu0 0.0
  %529 = vmatpush1.msra.mxu0 0.0
  %530 = vmatprep.subr.mxu0 0.0
  %531 = vmatpush1.msra.mxu0 0.0
  %532 = vmatprep.subr.mxu0 0.0
  %533 = vmatpush1.msra.mxu0 0.0
  %534 = vmatprep.subr.mxu0 0.0
  %535 = vmatpush1.msra.mxu0 0.0
  %536 = vmatprep.subr.mxu0 0.0
  %537 = vmatpush1.msra.mxu0 0.0
  %538 = vmatprep.subr.mxu0 0.0
  %539 = vmatpush1.msra.mxu0 0.0
  %540 = vmatprep.subr.mxu0 0.0
  %541 = vmatpush1.msra.mxu0 0.0
  %542 = vmatprep.subr.mxu0 0.0
  %543 = vmatpush1.msra.mxu0 0.0
  %544 = vmatprep.subr.mxu0 0.0
  %545 = vmatpush1.msra.mxu0 0.0
  %546 = vmatprep.subr.mxu0 0.0
  %547 = vmatpush1.msra.mxu0 0.0
  %548 = vmatprep.subr.mxu0 0.0
  %549 = vmatpush1.msra.mxu0 0.0
  %550 = vmatprep.subr.mxu0 0.0
  %551 = vmatpush1.msra.mxu0 0.0
  %552 = vmatprep.subr.mxu0 0.0
  %553 = vmatpush1.msra.mxu0 0.0
  %554 = vmatprep.subr.mxu0 0.0
  %555 = vmatpush1.msra.mxu0 0.0
  %556 = vmatprep.subr.mxu0 0.0
  %557 = vmatpush1.msra.mxu0 0.0
  %558 = vmatprep.subr.mxu0 0.0
  %559 = vmatpush1.msra.mxu0 0.0
  %560 = vmatprep.subr.mxu0 0.0
  %561 = vmatpush1.msra.mxu0 0.0
  %562 = vmatprep.subr.mxu0 0.0
  %563 = vmatpush1.msra.mxu0 0.0
  %564 = vmatprep.subr.mxu0 0.0
  %565 = vmatpush1.msra.mxu0 0.0
  %566 = vmatprep.subr.mxu0 0.0
  %567 = vmatpush1.msra.mxu0 0.0
  %568 = vmatprep.subr.mxu0 0.0
  %569 = vmatpush1.msra.mxu0 0.0
  %570 = vmatprep.mubr.f32.mxu0 0.0
  %571 = vmatmul.mubr.f32.gmra.mrb[0].mxu0 %v504
  %v572 = vpop.f32.mrb[0].mxu0
  %v573 = vadd.f32 0.0, %v572
  %v574 = vpop.f32.mrb[0].mxu0
  %575 = vdwg.mxu0
  %v576 = vadd.f32 %v500, %v573
  %v577 = vxor.u32 %v576, 2147483648
  %v578 = vmul.f32 %v577, 1.442695
  %v579 = vpow.pop %v578
  %v580 = vadd.f32 %v579, 1.0
  %v581 = vrcp.pop %v580
  %v582 = vmul.f32 1.0, %v581
  %v583 = vmul.f32 %v582, %v190
  %v584 = vadd.f32 %v583, %v191
  %v585 = vmul.f32 %v584, %v492
  %587 = vrot.lane.b32.xlu0 %v584, 32
  %v588 = vpop.permute.xlu0 %587
  %v590 = vmul.f32 %v584, %v588
  %592 = vrot.lane.b32.xlu0 %v590, 32
  %v593 = vpop.permute.xlu0 %592
  %v595 = vadd.f32 %v585, %v593
  %v596 = vtanh.pop %v595
  %598 = vrot.lane.b32.xlu0 %v596, 32
  %v599 = vpop.permute.xlu0 %598
  %v601 = vmul.f32 %v584, %v599
  %s602 = scalar_lea.vmem [#allocation2], 32
  %v603 = vld [vmem:[%s602] sm:$0xff]
  %605 = vrot.lane.b32.xlu0 %v601, 64
  %v606 = vpop.permute.xlu0 %605
  %v607 = vsel %vm193, %v606, 0
  %609 = vmatprep.subr.mxu0 0.0
  %610 = vmatpush1.msra.mxu0 %v183
  %611 = vmatprep.subr.mxu0 0.0
  %612 = vmatpush1.msra.mxu0 %v184
  %613 = vmatprep.subr.mxu0 0.0
  %614 = vmatpush1.msra.mxu0 %v185
  %615 = vmatprep.subr.mxu0 0.0
  %616 = vmatpush1.msra.mxu0 %v186
  %617 = vmatprep.subr.mxu0 0.0
  %618 = vmatpush1.msra.mxu0 0.0
  %619 = vmatprep.subr.mxu0 0.0
  %620 = vmatpush1.msra.mxu0 0.0
  %621 = vmatprep.subr.mxu0 0.0
  %622 = vmatpush1.msra.mxu0 0.0
  %623 = vmatprep.subr.mxu0 0.0
  %624 = vmatpush1.msra.mxu0 0.0
  %625 = vmatprep.subr.mxu0 0.0
  %626 = vmatpush1.msra.mxu0 0.0
  %627 = vmatprep.subr.mxu0 0.0
  %628 = vmatpush1.msra.mxu0 0.0
  %629 = vmatprep.subr.mxu0 0.0
  %630 = vmatpush1.msra.mxu0 0.0
  %631 = vmatprep.subr.mxu0 0.0
  %632 = vmatpush1.msra.mxu0 0.0
  %633 = vmatprep.subr.mxu0 0.0
  %634 = vmatpush1.msra.mxu0 0.0
  %635 = vmatprep.subr.mxu0 0.0
  %636 = vmatpush1.msra.mxu0 0.0
  %637 = vmatprep.subr.mxu0 0.0
  %638 = vmatpush1.msra.mxu0 0.0
  %639 = vmatprep.subr.mxu0 0.0
  %640 = vmatpush1.msra.mxu0 0.0
  %641 = vmatprep.subr.mxu0 0.0
  %642 = vmatpush1.msra.mxu0 0.0
  %643 = vmatprep.subr.mxu0 0.0
  %644 = vmatpush1.msra.mxu0 0.0
  %645 = vmatprep.subr.mxu0 0.0
  %646 = vmatpush1.msra.mxu0 0.0
  %647 = vmatprep.subr.mxu0 0.0
  %648 = vmatpush1.msra.mxu0 0.0
  %649 = vmatprep.subr.mxu0 0.0
  %650 = vmatpush1.msra.mxu0 0.0
  %651 = vmatprep.subr.mxu0 0.0
  %652 = vmatpush1.msra.mxu0 0.0
  %653 = vmatprep.subr.mxu0 0.0
  %654 = vmatpush1.msra.mxu0 0.0
  %655 = vmatprep.subr.mxu0 0.0
  %656 = vmatpush1.msra.mxu0 0.0
  %657 = vmatprep.subr.mxu0 0.0
  %658 = vmatpush1.msra.mxu0 0.0
  %659 = vmatprep.subr.mxu0 0.0
  %660 = vmatpush1.msra.mxu0 0.0
  %661 = vmatprep.subr.mxu0 0.0
  %662 = vmatpush1.msra.mxu0 0.0
  %663 = vmatprep.subr.mxu0 0.0
  %664 = vmatpush1.msra.mxu0 0.0
  %665 = vmatprep.subr.mxu0 0.0
  %666 = vmatpush1.msra.mxu0 0.0
  %667 = vmatprep.subr.mxu0 0.0
  %668 = vmatpush1.msra.mxu0 0.0
  %669 = vmatprep.subr.mxu0 0.0
  %670 = vmatpush1.msra.mxu0 0.0
  %671 = vmatprep.subr.mxu0 0.0
  %672 = vmatpush1.msra.mxu0 0.0
  %673 = vmatprep.mubr.f32.mxu0 0.0
  %674 = vmatmul.mubr.f32.gmra.mrb[0].mxu0 %v607
  %v675 = vpop.f32.mrb[0].mxu0
  %v676 = vadd.f32 0.0, %v675
  %v677 = vpop.f32.mrb[0].mxu0
  %678 = vdwg.mxu0
  %v679 = vadd.f32 %v603, %v676
  %v680 = vxor.u32 %v679, 2147483648
  %v681 = vmul.f32 %v680, 1.442695
  %v682 = vpow.pop %v681
  %v683 = vadd.f32 %v682, 1.0
  %v684 = vrcp.pop %v683
  %v685 = vmul.f32 1.0, %v684
  %v686 = vmul.f32 %v685, %v190
  %v687 = vadd.f32 %v686, %v191
  %v688 = vmul.f32 %v687, %v595
  %690 = vrot.lane.b32.xlu0 %v687, 32
  %v691 = vpop.permute.xlu0 %690
  %v693 = vmul.f32 %v687, %v691
  %695 = vrot.lane.b32.xlu0 %v693, 32
  %v696 = vpop.permute.xlu0 %695
  %v698 = vadd.f32 %v688, %v696
  %v699 = vtanh.pop %v698
  %701 = vrot.lane.b32.xlu0 %v699, 32
  %v702 = vpop.permute.xlu0 %701
  %v704 = vmul.f32 %v687, %v702
  %s705 = scalar_lea.vmem [#allocation2], 40
  %v706 = vld [vmem:[%s705] sm:$0xff]
  %708 = vrot.lane.b32.xlu0 %v704, 64
  %v709 = vpop.permute.xlu0 %708
  %v710 = vsel %vm193, %v709, 0
  %712 = vmatprep.subr.mxu0 0.0
  %713 = vmatpush1.msra.mxu0 %v183
  %714 = vmatprep.subr.mxu0 0.0
  %715 = vmatpush1.msra.mxu0 %v184
  %716 = vmatprep.subr.mxu0 0.0
  %717 = vmatpush1.msra.mxu0 %v185
  %718 = vmatprep.subr.mxu0 0.0
  %719 = vmatpush1.msra.mxu0 %v186
  %720 = vmatprep.subr.mxu0 0.0
  %721 = vmatpush1.msra.mxu0 0.0
  %722 = vmatprep.subr.mxu0 0.0
  %723 = vmatpush1.msra.mxu0 0.0
  %724 = vmatprep.subr.mxu0 0.0
  %725 = vmatpush1.msra.mxu0 0.0
  %726 = vmatprep.subr.mxu0 0.0
  %727 = vmatpush1.msra.mxu0 0.0
  %728 = vmatprep.subr.mxu0 0.0
  %729 = vmatpush1.msra.mxu0 0.0
  %730 = vmatprep.subr.mxu0 0.0
  %731 = vmatpush1.msra.mxu0 0.0
  %732 = vmatprep.subr.mxu0 0.0
  %733 = vmatpush1.msra.mxu0 0.0
  %734 = vmatprep.subr.mxu0 0.0
  %735 = vmatpush1.msra.mxu0 0.0
  %736 = vmatprep.subr.mxu0 0.0
  %737 = vmatpush1.msra.mxu0 0.0
  %738 = vmatprep.subr.mxu0 0.0
  %739 = vmatpush1.msra.mxu0 0.0
  %740 = vmatprep.subr.mxu0 0.0
  %741 = vmatpush1.msra.mxu0 0.0
  %742 = vmatprep.subr.mxu0 0.0
  %743 = vmatpush1.msra.mxu0 0.0
  %744 = vmatprep.subr.mxu0 0.0
  %745 = vmatpush1.msra.mxu0 0.0
  %746 = vmatprep.subr.mxu0 0.0
  %747 = vmatpush1.msra.mxu0 0.0
  %748 = vmatprep.subr.mxu0 0.0
  %749 = vmatpush1.msra.mxu0 0.0
  %750 = vmatprep.subr.mxu0 0.0
  %751 = vmatpush1.msra.mxu0 0.0
  %752 = vmatprep.subr.mxu0 0.0
  %753 = vmatpush1.msra.mxu0 0.0
  %754 = vmatprep.subr.mxu0 0.0
  %755 = vmatpush1.msra.mxu0 0.0
  %756 = vmatprep.subr.mxu0 0.0
  %757 = vmatpush1.msra.mxu0 0.0
  %758 = vmatprep.subr.mxu0 0.0
  %759 = vmatpush1.msra.mxu0 0.0
  %760 = vmatprep.subr.mxu0 0.0
  %761 = vmatpush1.msra.mxu0 0.0
  %762 = vmatprep.subr.mxu0 0.0
  %763 = vmatpush1.msra.mxu0 0.0
  %764 = vmatprep.subr.mxu0 0.0
  %765 = vmatpush1.msra.mxu0 0.0
  %766 = vmatprep.subr.mxu0 0.0
  %767 = vmatpush1.msra.mxu0 0.0
  %768 = vmatprep.subr.mxu0 0.0
  %769 = vmatpush1.msra.mxu0 0.0
  %770 = vmatprep.subr.mxu0 0.0
  %771 = vmatpush1.msra.mxu0 0.0
  %772 = vmatprep.subr.mxu0 0.0
  %773 = vmatpush1.msra.mxu0 0.0
  %774 = vmatprep.subr.mxu0 0.0
  %775 = vmatpush1.msra.mxu0 0.0
  %776 = vmatprep.mubr.f32.mxu0 0.0
  %777 = vmatmul.mubr.f32.gmra.mrb[0].mxu0 %v710
  %v778 = vpop.f32.mrb[0].mxu0
  %v779 = vadd.f32 0.0, %v778
  %v780 = vpop.f32.mrb[0].mxu0
  %781 = vdwg.mxu0
  %v782 = vadd.f32 %v706, %v779
  %v783 = vxor.u32 %v782, 2147483648
  %v784 = vmul.f32 %v783, 1.442695
  %v785 = vpow.pop %v784
  %v786 = vadd.f32 %v785, 1.0
  %v787 = vrcp.pop %v786
  %v788 = vmul.f32 1.0, %v787
  %v789 = vmul.f32 %v788, %v190
  %v790 = vadd.f32 %v789, %v191
  %v791 = vmul.f32 %v790, %v698
  %793 = vrot.lane.b32.xlu0 %v790, 32
  %v794 = vpop.permute.xlu0 %793
  %v796 = vmul.f32 %v790, %v794
  %798 = vrot.lane.b32.xlu0 %v796, 32
  %v799 = vpop.permute.xlu0 %798
  %v801 = vadd.f32 %v791, %v799
  %v802 = vtanh.pop %v801
  %804 = vrot.lane.b32.xlu0 %v802, 32
  %v805 = vpop.permute.xlu0 %804
  %v807 = vmul.f32 %v790, %v805
  %s808 = scalar_lea.vmem [#allocation2], 48
  %v809 = vld [vmem:[%s808] sm:$0xff]
  %811 = vrot.lane.b32.xlu0 %v807, 64
  %v812 = vpop.permute.xlu0 %811
  %v813 = vsel %vm193, %v812, 0
  %815 = vmatprep.subr.mxu0 0.0
  %816 = vmatpush1.msra.mxu0 %v183
  %817 = vmatprep.subr.mxu0 0.0
  %818 = vmatpush1.msra.mxu0 %v184
  %819 = vmatprep.subr.mxu0 0.0
  %820 = vmatpush1.msra.mxu0 %v185
  %821 = vmatprep.subr.mxu0 0.0
  %822 = vmatpush1.msra.mxu0 %v186
  %823 = vmatprep.subr.mxu0 0.0
  %824 = vmatpush1.msra.mxu0 0.0
  %825 = vmatprep.subr.mxu0 0.0
  %826 = vmatpush1.msra.mxu0 0.0
  %827 = vmatprep.subr.mxu0 0.0
  %828 = vmatpush1.msra.mxu0 0.0
  %829 = vmatprep.subr.mxu0 0.0
  %830 = vmatpush1.msra.mxu0 0.0
  %831 = vmatprep.subr.mxu0 0.0
  %832 = vmatpush1.msra.mxu0 0.0
  %833 = vmatprep.subr.mxu0 0.0
  %834 = vmatpush1.msra.mxu0 0.0
  %835 = vmatprep.subr.mxu0 0.0
  %836 = vmatpush1.msra.mxu0 0.0
  %837 = vmatprep.subr.mxu0 0.0
  %838 = vmatpush1.msra.mxu0 0.0
  %839 = vmatprep.subr.mxu0 0.0
  %840 = vmatpush1.msra.mxu0 0.0
  %841 = vmatprep.subr.mxu0 0.0
  %842 = vmatpush1.msra.mxu0 0.0
  %843 = vmatprep.subr.mxu0 0.0
  %844 = vmatpush1.msra.mxu0 0.0
  %845 = vmatprep.subr.mxu0 0.0
  %846 = vmatpush1.msra.mxu0 0.0
  %847 = vmatprep.subr.mxu0 0.0
  %848 = vmatpush1.msra.mxu0 0.0
  %849 = vmatprep.subr.mxu0 0.0
  %850 = vmatpush1.msra.mxu0 0.0
  %851 = vmatprep.subr.mxu0 0.0
  %852 = vmatpush1.msra.mxu0 0.0
  %853 = vmatprep.subr.mxu0 0.0
  %854 = vmatpush1.msra.mxu0 0.0
  %855 = vmatprep.subr.mxu0 0.0
  %856 = vmatpush1.msra.mxu0 0.0
  %857 = vmatprep.subr.mxu0 0.0
  %858 = vmatpush1.msra.mxu0 0.0
  %859 = vmatprep.subr.mxu0 0.0
  %860 = vmatpush1.msra.mxu0 0.0
  %861 = vmatprep.subr.mxu0 0.0
  %862 = vmatpush1.msra.mxu0 0.0
  %863 = vmatprep.subr.mxu0 0.0
  %864 = vmatpush1.msra.mxu0 0.0
  %865 = vmatprep.subr.mxu0 0.0
  %866 = vmatpush1.msra.mxu0 0.0
  %867 = vmatprep.subr.mxu0 0.0
  %868 = vmatpush1.msra.mxu0 0.0
  %869 = vmatprep.subr.mxu0 0.0
  %870 = vmatpush1.msra.mxu0 0.0
  %871 = vmatprep.subr.mxu0 0.0
  %872 = vmatpush1.msra.mxu0 0.0
  %873 = vmatprep.subr.mxu0 0.0
  %874 = vmatpush1.msra.mxu0 0.0
  %875 = vmatprep.subr.mxu0 0.0
  %876 = vmatpush1.msra.mxu0 0.0
  %877 = vmatprep.subr.mxu0 0.0
  %878 = vmatpush1.msra.mxu0 0.0
  %879 = vmatprep.mubr.f32.mxu0 0.0
  %880 = vmatmul.mubr.f32.gmra.mrb[0].mxu0 %v813
  %v881 = vpop.f32.mrb[0].mxu0
  %v882 = vadd.f32 0.0, %v881
  %v883 = vpop.f32.mrb[0].mxu0
  %884 = vdwg.mxu0
  %v885 = vadd.f32 %v809, %v882
  %v886 = vxor.u32 %v885, 2147483648
  %v887 = vmul.f32 %v886, 1.442695
  %v888 = vpow.pop %v887
  %v889 = vadd.f32 %v888, 1.0
  %v890 = vrcp.pop %v889
  %v891 = vmul.f32 1.0, %v890
  %v892 = vmul.f32 %v891, %v190
  %v893 = vadd.f32 %v892, %v191
  %v894 = vmul.f32 %v893, %v801
  %896 = vrot.lane.b32.xlu0 %v893, 32
  %v897 = vpop.permute.xlu0 %896
  %v899 = vmul.f32 %v893, %v897
  %901 = vrot.lane.b32.xlu0 %v899, 32
  %v902 = vpop.permute.xlu0 %901
  %v904 = vadd.f32 %v894, %v902
  %v905 = vtanh.pop %v904
  %907 = vrot.lane.b32.xlu0 %v905, 32
  %v908 = vpop.permute.xlu0 %907
  %v910 = vmul.f32 %v893, %v908
  %s911 = scalar_lea.vmem [#allocation2], 56
  %v912 = vld [vmem:[%s911] sm:$0xff]
  %914 = vrot.lane.b32.xlu0 %v910, 64
  %v915 = vpop.permute.xlu0 %914
  %v916 = vsel %vm193, %v915, 0
  %918 = vmatprep.subr.mxu0 0.0
  %919 = vmatpush1.msra.mxu0 %v183
  %920 = vmatprep.subr.mxu0 0.0
  %921 = vmatpush1.msra.mxu0 %v184
  %922 = vmatprep.subr.mxu0 0.0
  %923 = vmatpush1.msra.mxu0 %v185
  %924 = vmatprep.subr.mxu0 0.0
  %925 = vmatpush1.msra.mxu0 %v186
  %926 = vmatprep.subr.mxu0 0.0
  %927 = vmatpush1.msra.mxu0 0.0
  %928 = vmatprep.subr.mxu0 0.0
  %929 = vmatpush1.msra.mxu0 0.0
  %930 = vmatprep.subr.mxu0 0.0
  %931 = vmatpush1.msra.mxu0 0.0
  %932 = vmatprep.subr.mxu0 0.0
  %933 = vmatpush1.msra.mxu0 0.0
  %934 = vmatprep.subr.mxu0 0.0
  %935 = vmatpush1.msra.mxu0 0.0
  %936 = vmatprep.subr.mxu0 0.0
  %937 = vmatpush1.msra.mxu0 0.0
  %938 = vmatprep.subr.mxu0 0.0
  %939 = vmatpush1.msra.mxu0 0.0
  %940 = vmatprep.subr.mxu0 0.0
  %941 = vmatpush1.msra.mxu0 0.0
  %942 = vmatprep.subr.mxu0 0.0
  %943 = vmatpush1.msra.mxu0 0.0
  %944 = vmatprep.subr.mxu0 0.0
  %945 = vmatpush1.msra.mxu0 0.0
  %946 = vmatprep.subr.mxu0 0.0
  %947 = vmatpush1.msra.mxu0 0.0
  %948 = vmatprep.subr.mxu0 0.0
  %949 = vmatpush1.msra.mxu0 0.0
  %950 = vmatprep.subr.mxu0 0.0
  %951 = vmatpush1.msra.mxu0 0.0
  %952 = vmatprep.subr.mxu0 0.0
  %953 = vmatpush1.msra.mxu0 0.0
  %954 = vmatprep.subr.mxu0 0.0
  %955 = vmatpush1.msra.mxu0 0.0
  %956 = vmatprep.subr.mxu0 0.0
  %957 = vmatpush1.msra.mxu0 0.0
  %958 = vmatprep.subr.mxu0 0.0
  %959 = vmatpush1.msra.mxu0 0.0
  %960 = vmatprep.subr.mxu0 0.0
  %961 = vmatpush1.msra.mxu0 0.0
  %962 = vmatprep.subr.mxu0 0.0
  %963 = vmatpush1.msra.mxu0 0.0
  %964 = vmatprep.subr.mxu0 0.0
  %965 = vmatpush1.msra.mxu0 0.0
  %966 = vmatprep.subr.mxu0 0.0
  %967 = vmatpush1.msra.mxu0 0.0
  %968 = vmatprep.subr.mxu0 0.0
  %969 = vmatpush1.msra.mxu0 0.0
  %970 = vmatprep.subr.mxu0 0.0
  %971 = vmatpush1.msra.mxu0 0.0
  %972 = vmatprep.subr.mxu0 0.0
  %973 = vmatpush1.msra.mxu0 0.0
  %974 = vmatprep.subr.mxu0 0.0
  %975 = vmatpush1.msra.mxu0 0.0
  %976 = vmatprep.subr.mxu0 0.0
  %977 = vmatpush1.msra.mxu0 0.0
  %978 = vmatprep.subr.mxu0 0.0
  %979 = vmatpush1.msra.mxu0 0.0
  %980 = vmatprep.subr.mxu0 0.0
  %981 = vmatpush1.msra.mxu0 0.0
  %982 = vmatprep.mubr.f32.mxu0 0.0
  %983 = vmatmul.mubr.f32.gmra.mrb[0].mxu0 %v916
  %v984 = vpop.f32.mrb[0].mxu0
  %v985 = vadd.f32 0.0, %v984
  %v986 = vpop.f32.mrb[0].mxu0
  %987 = vdwg.mxu0
  %v988 = vadd.f32 %v912, %v985
  %v989 = vxor.u32 %v988, 2147483648
  %v990 = vmul.f32 %v989, 1.442695
  %v991 = vpow.pop %v990
  %v992 = vadd.f32 %v991, 1.0
  %v993 = vrcp.pop %v992
  %v994 = vmul.f32 1.0, %v993
  %v995 = vmul.f32 %v994, %v190
  %v996 = vadd.f32 %v995, %v191
  %v997 = vmul.f32 %v996, %v904
  %999 = vrot.lane.b32.xlu0 %v996, 32
  %v1000 = vpop.permute.xlu0 %999
  %v1002 = vmul.f32 %v996, %v1000
  %1004 = vrot.lane.b32.xlu0 %v1002, 32
  %v1005 = vpop.permute.xlu0 %1004
  %v1007 = vadd.f32 %v997, %v1005
  %v1008 = vtanh.pop %v1007
  %1010 = vrot.lane.b32.xlu0 %v1008, 32
  %v1011 = vpop.permute.xlu0 %1010
  %v1013 = vmul.f32 %v996, %v1011
  %v1014 = vld [vmem:[%s4] sm:$0x1]
  %v1016 = vlaneseq
  %v1017 = vshrl.u32 %v1016, 7
  %v1018 = vsub.s32 0, %v1017
  %v1019 = vrot.slane %v1014, %v1018
  %1020 = vrot.lane.b32.xlu0 %v1019, 64
  %v1021 = vpop.permute.xlu0 %1020
  %v1023 = vmul.f32 %v1013, %v1021
  %1025 = vrot.lane.b32.xlu0 %v1023, 64
  %v1026 = vpop.permute.xlu0 %1025
  %v1028 = vsel %vm193, %v1026, 0.0
  %1029 = vadd.xlane.f32.xlu0 %v1028
  %v1030 = vpop.xlane.xlu0 %1029
  %v1031 = vld [vmem:[#allocation3] sm:$0x1]
  %v1033 = vlaneseq
  %v1034 = vshrl.u32 %v1033, 7
  %v1035 = vsub.s32 0, %v1034
  %v1036 = vrot.slane %v1031, %v1035
  %v1038 = vadd.f32 %v1030, %v1036
  %vm1039 = vcmask 7168
  %1040 = vst.msk [vmem:[%s6] sm:$0xff] %vm1039, %v1038
  // Predicated region
  $region26: #{tpu_custom_call.1} parent=0 // pred_check
    _
  $region27: #{tpu_custom_call.1} parent=0 // pred_check_branch
    %1042 = sbr.rel (0) target = $region29
  $region28: #{tpu_custom_call.1} parent=0 // pred_region
    _
  $region29: #{tpu_custom_call.1} parent=0 // pred_fallthru
    _
  // Predicated region
  $region30: #{tpu_custom_call.1} parent=0 // pred_check
    _
  $region31: #{tpu_custom_call.1} parent=0 // pred_check_branch
    %1044 = sbr.rel (0) target = $region33
  $region32: #{tpu_custom_call.1} parent=0 // pred_region
    _
  $region33: #{tpu_custom_call.1} parent=0 // pred_fallthru
    _

</llo_original>
